<compile_context>
chip_gen: v5e
topology: v5e:2x2
jax: 0.10.0
libtpu: 0.0.40
codegen_flags: <defaults>
</compile_context>

<pallas_src>
import math
import functools

import jax
import jax.numpy as jnp
from jax.experimental import pallas as pl
from jax.experimental.pallas import tpu as pltpu

PE_ORDER = 8
PE_DIM = 4 * PE_ORDER
NUM_HIDDEN_LAYERS = 3
SOFTPLUS_THRESHOLD = 20.0  # torch.nn.Softplus default (beta=1, threshold=20)
HALF_PI = math.pi / 2.0


def _softplus(x, eup_dtype=jnp.float32):
    """torch.nn.Softplus(beta=1, threshold=20): linear above threshold.

    eup_dtype lets the exp/log run on the EUP in bf16 (v6e/v7x only) while the
    surrounding arithmetic stays f32; the default f32 keeps the 1e-4 numerics.
    """
    xe = x.astype(eup_dtype)
    safe = jnp.minimum(xe, SOFTPLUS_THRESHOLD)
    sp = jnp.log(1.0 + jnp.exp(safe)).astype(x.dtype)
    return jnp.where(x > SOFTPLUS_THRESHOLD, x, sp)


def _round_up(x, m):
    return ((x + m - 1) // m) * m


def _decoder_kernel(coords_ref, w1_ref, b1_ref, wm_ref, bm_ref, wl_ref, bl_ref,
                    out_ref, *, num_mid_layers, eup_dtype):
    # Feature-major tiles: coords (2, TM), activations (feat, TM), output (3, TM).
    xy = coords_ref[...].astype(jnp.float32)                    # rows [x; y]

    # Positional encoding, double-angle form.  Base angles are packed 4 rows deep so a
    # single lane-dense EUP sin yields [sin x; sin y; cos x; cos y]; higher octaves use
    # the VPU recurrence  sin(2a) = 2 sin(a) cos(a),  cos(2a) = 1 - 2 sin^2(a).
    # (The recurrence stays in f32: its error doubles per octave, so bf16 here would
    #  blow past the test tolerance; only softplus gets the optional bf16-EUP path.)
    angles = jnp.concatenate([xy, xy + HALF_PI], axis=0)        # (4, TM)
    base = jnp.sin(angles)                                      # [sinx; siny; cosx; cosy]
    s = base[0:2, :]                                            # sin(2^0 * (x, y))
    c = base[2:4, :]                                            # cos(2^0 * (x, y))
    pieces = [s, c]
    for _ in range(PE_ORDER - 1):
        s, c = 2.0 * s * c, 1.0 - 2.0 * (s * s)
        pieces.append(s)
        pieces.append(c)
    # Row order matches torch: rows 4i,4i+1 = sin(2^i*(x,y)); rows 4i+2,4i+3 = cos(...).
    t = jnp.concatenate(pieces, axis=0)                         # (PE_DIM, TM)

    # First hidden layer (grid-structure linear already fused into w1/b1 in wrapper).
    h = _softplus(jnp.dot(w1_ref[...], t, preferred_element_type=jnp.float32)
                  + b1_ref[...], eup_dtype)
    # Shared intermediate layer, reused exactly as the PyTorch module does.
    for _ in range(num_mid_layers):
        h = _softplus(jnp.dot(wm_ref[...], h, preferred_element_type=jnp.float32)
                      + bm_ref[...], eup_dtype)
    out = jnp.dot(wl_ref[...], h, preferred_element_type=jnp.float32) + bl_ref[...]
    out_ref[...] = out.astype(out_ref.dtype)                    # (3, TM) lane-dense store


def decoder_forward(coords_hw2, params, *, tm=8192, eup_dtype=jnp.float32):
    H, W, _ = coords_hw2.shape
    N = H * W
    wg, bg, w1, b1, wm, bm, wl, bl = params
    out_dim = wl.shape[1]

    # Fuse the grid-structure substitute into the first hidden layer (valid because it
    # is a pure Linear with no nonlinearity in between):
    #   (t @ wg + bg) @ w1 + b1 == t @ (wg @ w1) + (bg @ w1 + b1)
    # TODO(synk): grid_structure is an externally injected module in the original code;
    # if it is anything but a Linear, this fusion (and the kernel) must change.
    w1f = jnp.dot(wg, w1, preferred_element_type=jnp.float32)        # (PE_DIM, hidden)
    b1f = jnp.dot(bg, w1, preferred_element_type=jnp.float32) + b1   # (1, hidden)

    # Feature-major (transposed) weights so every matmul result is lane-dense in TM.
    w1t, b1t = w1f.T, b1f.T              # (hidden, PE_DIM), (hidden, 1)
    wmt, bmt = wm.T, bm.T                # (hidden, hidden), (hidden, 1)
    wlt, blt = wl.T, bl.T                # (out_dim, hidden), (out_dim, 1)

    # Feature-major coords (2, N).
    # TODO(synk): this transpose is a separate XLA op (one extra HBM pass over the
    # input); folding it into the kernel needs a minor-dim-2 transpose in Mosaic.
    coords_t = coords_hw2.reshape(N, 2).astype(jnp.float32).T

    # Row tile: as large as sensible, but capped so the grid keeps >= 2 steps (so the
    # "parallel" axis shards across v7x's two TensorCores) and always a multiple of 128
    # so stores stay lane-dense.  Padding is decoupled from the tile: grid is a cdiv and
    # Pallas masks the partial last block, so <=127 garbage columns are ever computed.
    n128 = _round_up(N, 128)
    half = _round_up(pl.cdiv(n128, 2), 128)
    tm_eff = max(128, min(tm, half))
    grid = pl.cdiv(N, tm_eff)

    def invariant_spec(arr):
        # TODO(synk): pipeline_mode=pl.Buffered(1) would drop the pointless second
        # buffer on these grid-invariant weights; left at the default for portability.
        return pl.BlockSpec(arr.shape, lambda i: (0, 0))

    kernel = functools.partial(_decoder_kernel,
                               num_mid_layers=NUM_HIDDEN_LAYERS - 2,
                               eup_dtype=eup_dtype)

    out_t = pl.pallas_call(
        kernel,
        out_shape=jax.ShapeDtypeStruct((out_dim, N), jnp.float32),
        grid_spec=pltpu.PrefetchScalarGridSpec(
            num_scalar_prefetch=0,
            grid=(grid,),
            in_specs=[
                pl.BlockSpec((2, tm_eff), lambda i: (0, i)),   # coords column tile
                invariant_spec(w1t), invariant_spec(b1t),
                invariant_spec(wmt), invariant_spec(bmt),
                invariant_spec(wlt), invariant_spec(blt),
            ],
            out_specs=pl.BlockSpec((out_dim, tm_eff), lambda i: (0, i)),
        ),
        compiler_params=pltpu.CompilerParams(
            dimension_semantics=("parallel",),
            vmem_limit_bytes=32 * 1024 * 1024),
    )(coords_t, w1t, b1t, wmt, bmt, wlt, blt)

    # TODO(synk): if a downstream consumer exists, fuse this transpose into it instead
    # of paying a standalone XLA transpose op.
    return out_t.T.reshape(H, W, out_dim)


def decoder_reference(coords_hw2, params):
    """Pure-JAX reference mirroring the PyTorch forward (unfused, exact sin/cos)."""
    H, W, _ = coords_hw2.shape
    c = coords_hw2.reshape(H * W, 2).astype(jnp.float32)
    parts = []
    for i in range(PE_ORDER):
        parts.append(jnp.sin((2.0 ** i) * c))
        parts.append(jnp.cos((2.0 ** i) * c))
    t = jnp.concatenate(parts, axis=-1)
    wg, bg, w1, b1, wm, bm, wl, bl = params
    # TODO(synk): grid_structure is an externally injected module in the original code;
    # substituted here (and in the kernel) by a deterministic Linear.
    feat = t @ wg + bg
    h = _softplus(feat @ w1 + b1)
    for _ in range(NUM_HIDDEN_LAYERS - 2):
        h = _softplus(h @ wm + bm)
    out = h @ wl + bl
    return out.reshape(H, W, wl.shape[1])


if __name__ == "__main__":
    H, W = 16, 16                  # spatial -> N=256, exercises a 2-step grid
    input_dim, hidden_dim, output_dim = 32, 32, 3
    pe_dim = PE_DIM                # 32

    key = jax.random.PRNGKey(0)
    ks = jax.random.split(key, 9)

    def init(k, shape, scale=0.1):
        return (scale * jax.random.normal(k, shape)).astype(jnp.float32)

    params = (
        init(ks[0], (pe_dim, input_dim)),       # grid_structure substitute W
        init(ks[1], (1, input_dim)),            # grid_structure substitute b
        init(ks[2], (input_dim, hidden_dim)),   # first_hidden_layer W
        init(ks[3], (1, hidden_dim)),           # first_hidden_layer b
        init(ks[4], (hidden_dim, hidden_dim)),  # intermediate layer W (shared)
        init(ks[5], (1, hidden_dim)),           # intermediate layer b (shared)
        init(ks[6], (hidden_dim, output_dim)),  # last_hidden_layer W
        init(ks[7], (1, output_dim)),           # last_hidden_layer b
    )

    coords = jax.random.uniform(ks[8], (H, W, 2), dtype=jnp.float32)

    out = decoder_forward(coords, params)
    out = jax.block_until_ready(out)

    ref = decoder_reference(coords, params)
    assert out.shape == (H, W, output_dim)
    assert bool(jnp.allclose(out, ref, rtol=1e-4, atol=1e-4)), "mismatch vs reference"

    print("KERNEL_OK")
</pallas_src>

<mosaic_0001>
module attributes {stable_mosaic.version = 11 : i64} {
  func.func @_decoder_kernel(%arg0: i32, %arg1: memref<2x128xf32, #tpu.memory_space<vmem>>, %arg2: memref<32x32xf32, #tpu.memory_space<vmem>>, %arg3: memref<32x1xf32, #tpu.memory_space<vmem>>, %arg4: memref<32x32xf32, #tpu.memory_space<vmem>>, %arg5: memref<32x1xf32, #tpu.memory_space<vmem>>, %arg6: memref<3x32xf32, #tpu.memory_space<vmem>>, %arg7: memref<3x1xf32, #tpu.memory_space<vmem>>, %arg8: memref<3x128xf32, #tpu.memory_space<vmem>>) attributes {dimension_semantics = [#tpu.dimension_semantics<parallel>], iteration_bounds = array<i64: 2>, scalar_prefetch = 0 : i64, scratch_operands = 0 : i64, tpu.core_type = #tpu.core_type<tc>, window_params = [{transform_indices = @transform_0, window_bounds = array<i64: 2, 128>}, {pipeline_mode = #tpu.pipeline_mode<synchronous>, transform_indices = @transform_1, window_bounds = array<i64: 32, 32>}, {pipeline_mode = #tpu.pipeline_mode<synchronous>, transform_indices = @transform_2, window_bounds = array<i64: 32, 1>}, {pipeline_mode = #tpu.pipeline_mode<synchronous>, transform_indices = @transform_3, window_bounds = array<i64: 32, 32>}, {pipeline_mode = #tpu.pipeline_mode<synchronous>, transform_indices = @transform_4, window_bounds = array<i64: 32, 1>}, {pipeline_mode = #tpu.pipeline_mode<synchronous>, transform_indices = @transform_5, window_bounds = array<i64: 3, 32>}, {pipeline_mode = #tpu.pipeline_mode<synchronous>, transform_indices = @transform_6, window_bounds = array<i64: 3, 1>}, {transform_indices = @transform_7, window_bounds = array<i64: 3, 128>}]} {
    %c0 = arith.constant 0 : index
    %c0_0 = arith.constant 0 : index
    %0 = vector.load %arg1[%c0, %c0_0] : memref<2x128xf32, #tpu.memory_space<vmem>>, vector<2x128xf32>
    %cst = arith.constant 1.57079637 : f32
    %1 = vector.broadcast %cst : f32 to vector<2x128xf32>
    %2 = arith.addf %0, %1 : vector<2x128xf32>
    %3 = tpu.concatenate %0, %2 in 0 : vector<2x128xf32>, vector<2x128xf32> -> vector<4x128xf32>
    %4 = math.sin %3 : vector<4x128xf32>
    %5 = vector.extract_strided_slice %4 {offsets = [0, 0], sizes = [2, 128], strides = [1, 1]} : vector<4x128xf32> to vector<2x128xf32>
    %6 = vector.extract_strided_slice %4 {offsets = [2, 0], sizes = [2, 128], strides = [1, 1]} : vector<4x128xf32> to vector<2x128xf32>
    %cst_1 = arith.constant 2.000000e+00 : f32
    %7 = vector.broadcast %cst_1 : f32 to vector<2x128xf32>
    %8 = arith.mulf %7, %5 : vector<2x128xf32>
    %9 = arith.mulf %8, %6 : vector<2x128xf32>
    %10 = arith.mulf %5, %5 : vector<2x128xf32>
    %cst_2 = arith.constant 2.000000e+00 : f32
    %11 = vector.broadcast %cst_2 : f32 to vector<2x128xf32>
    %12 = arith.mulf %11, %10 : vector<2x128xf32>
    %cst_3 = arith.constant 1.000000e+00 : f32
    %13 = vector.broadcast %cst_3 : f32 to vector<2x128xf32>
    %14 = arith.subf %13, %12 : vector<2x128xf32>
    %cst_4 = arith.constant 2.000000e+00 : f32
    %15 = vector.broadcast %cst_4 : f32 to vector<2x128xf32>
    %16 = arith.mulf %15, %9 : vector<2x128xf32>
    %17 = arith.mulf %16, %14 : vector<2x128xf32>
    %18 = arith.mulf %9, %9 : vector<2x128xf32>
    %cst_5 = arith.constant 2.000000e+00 : f32
    %19 = vector.broadcast %cst_5 : f32 to vector<2x128xf32>
    %20 = arith.mulf %19, %18 : vector<2x128xf32>
    %cst_6 = arith.constant 1.000000e+00 : f32
    %21 = vector.broadcast %cst_6 : f32 to vector<2x128xf32>
    %22 = arith.subf %21, %20 : vector<2x128xf32>
    %cst_7 = arith.constant 2.000000e+00 : f32
    %23 = vector.broadcast %cst_7 : f32 to vector<2x128xf32>
    %24 = arith.mulf %23, %17 : vector<2x128xf32>
    %25 = arith.mulf %24, %22 : vector<2x128xf32>
    %26 = arith.mulf %17, %17 : vector<2x128xf32>
    %cst_8 = arith.constant 2.000000e+00 : f32
    %27 = vector.broadcast %cst_8 : f32 to vector<2x128xf32>
    %28 = arith.mulf %27, %26 : vector<2x128xf32>
    %cst_9 = arith.constant 1.000000e+00 : f32
    %29 = vector.broadcast %cst_9 : f32 to vector<2x128xf32>
    %30 = arith.subf %29, %28 : vector<2x128xf32>
    %cst_10 = arith.constant 2.000000e+00 : f32
    %31 = vector.broadcast %cst_10 : f32 to vector<2x128xf32>
    %32 = arith.mulf %31, %25 : vector<2x128xf32>
    %33 = arith.mulf %32, %30 : vector<2x128xf32>
    %34 = arith.mulf %25, %25 : vector<2x128xf32>
    %cst_11 = arith.constant 2.000000e+00 : f32
    %35 = vector.broadcast %cst_11 : f32 to vector<2x128xf32>
    %36 = arith.mulf %35, %34 : vector<2x128xf32>
    %cst_12 = arith.constant 1.000000e+00 : f32
    %37 = vector.broadcast %cst_12 : f32 to vector<2x128xf32>
    %38 = arith.subf %37, %36 : vector<2x128xf32>
    %cst_13 = arith.constant 2.000000e+00 : f32
    %39 = vector.broadcast %cst_13 : f32 to vector<2x128xf32>
    %40 = arith.mulf %39, %33 : vector<2x128xf32>
    %41 = arith.mulf %40, %38 : vector<2x128xf32>
    %42 = arith.mulf %33, %33 : vector<2x128xf32>
    %cst_14 = arith.constant 2.000000e+00 : f32
    %43 = vector.broadcast %cst_14 : f32 to vector<2x128xf32>
    %44 = arith.mulf %43, %42 : vector<2x128xf32>
    %cst_15 = arith.constant 1.000000e+00 : f32
    %45 = vector.broadcast %cst_15 : f32 to vector<2x128xf32>
    %46 = arith.subf %45, %44 : vector<2x128xf32>
    %cst_16 = arith.constant 2.000000e+00 : f32
    %47 = vector.broadcast %cst_16 : f32 to vector<2x128xf32>
    %48 = arith.mulf %47, %41 : vector<2x128xf32>
    %49 = arith.mulf %48, %46 : vector<2x128xf32>
    %50 = arith.mulf %41, %41 : vector<2x128xf32>
    %cst_17 = arith.constant 2.000000e+00 : f32
    %51 = vector.broadcast %cst_17 : f32 to vector<2x128xf32>
    %52 = arith.mulf %51, %50 : vector<2x128xf32>
    %cst_18 = arith.constant 1.000000e+00 : f32
    %53 = vector.broadcast %cst_18 : f32 to vector<2x128xf32>
    %54 = arith.subf %53, %52 : vector<2x128xf32>
    %cst_19 = arith.constant 2.000000e+00 : f32
    %55 = vector.broadcast %cst_19 : f32 to vector<2x128xf32>
    %56 = arith.mulf %55, %49 : vector<2x128xf32>
    %57 = arith.mulf %56, %54 : vector<2x128xf32>
    %58 = arith.mulf %49, %49 : vector<2x128xf32>
    %cst_20 = arith.constant 2.000000e+00 : f32
    %59 = vector.broadcast %cst_20 : f32 to vector<2x128xf32>
    %60 = arith.mulf %59, %58 : vector<2x128xf32>
    %cst_21 = arith.constant 1.000000e+00 : f32
    %61 = vector.broadcast %cst_21 : f32 to vector<2x128xf32>
    %62 = arith.subf %61, %60 : vector<2x128xf32>
    %63 = tpu.concatenate %5, %6, %9, %14, %17, %22, %25, %30, %33, %38, %41, %46, %49, %54, %57, %62 in 0 : vector<2x128xf32>, vector<2x128xf32>, vector<2x128xf32>, vector<2x128xf32>, vector<2x128xf32>, vector<2x128xf32>, vector<2x128xf32>, vector<2x128xf32>, vector<2x128xf32>, vector<2x128xf32>, vector<2x128xf32>, vector<2x128xf32>, vector<2x128xf32>, vector<2x128xf32>, vector<2x128xf32>, vector<2x128xf32> -> vector<32x128xf32>
    %c0_22 = arith.constant 0 : index
    %c0_23 = arith.constant 0 : index
    %64 = vector.load %arg2[%c0_22, %c0_23] : memref<32x32xf32, #tpu.memory_space<vmem>>, vector<32x32xf32>
    %cst_24 = arith.constant dense<0.000000e+00> : vector<32x128xf32>
    %65 = tpu.matmul %64, %63, %cst_24 {dimension_numbers = #tpu.dot_dimension_numbers<[1], [0], [0], [1], [0, 0, 1, 1], [], []>} : vector<32x32xf32>, vector<32x128xf32>, vector<32x128xf32> -> vector<32x128xf32>
    %c0_25 = arith.constant 0 : index
    %c0_26 = arith.constant 0 : index
    %66 = vector.load %arg3[%c0_25, %c0_26] : memref<32x1xf32, #tpu.memory_space<vmem>>, vector<32x1xf32>
    %67 = vector.broadcast %66 : vector<32x1xf32> to vector<32x128xf32>
    %68 = arith.addf %65, %67 : vector<32x128xf32>
    %cst_27 = arith.constant 2.000000e+01 : f32
    %69 = vector.broadcast %cst_27 : f32 to vector<32x128xf32>
    %70 = arith.minimumf %68, %69 : vector<32x128xf32>
    %71 = math.exp %70 : vector<32x128xf32>
    %cst_28 = arith.constant 1.000000e+00 : f32
    %72 = vector.broadcast %cst_28 : f32 to vector<32x128xf32>
    %73 = arith.addf %72, %71 : vector<32x128xf32>
    %74 = math.log %73 : vector<32x128xf32>
    %cst_29 = arith.constant 2.000000e+01 : f32
    %75 = vector.broadcast %cst_29 : f32 to vector<32x128xf32>
    %76 = arith.cmpf ogt, %68, %75 : vector<32x128xf32>
    %77 = arith.select %76, %68, %74 : vector<32x128xi1>, vector<32x128xf32>
    %c0_30 = arith.constant 0 : index
    %c0_31 = arith.constant 0 : index
    %78 = vector.load %arg4[%c0_30, %c0_31] : memref<32x32xf32, #tpu.memory_space<vmem>>, vector<32x32xf32>
    %cst_32 = arith.constant dense<0.000000e+00> : vector<32x128xf32>
    %79 = tpu.matmul %78, %77, %cst_32 {dimension_numbers = #tpu.dot_dimension_numbers<[1], [0], [0], [1], [0, 0, 1, 1], [], []>} : vector<32x32xf32>, vector<32x128xf32>, vector<32x128xf32> -> vector<32x128xf32>
    %c0_33 = arith.constant 0 : index
    %c0_34 = arith.constant 0 : index
    %80 = vector.load %arg5[%c0_33, %c0_34] : memref<32x1xf32, #tpu.memory_space<vmem>>, vector<32x1xf32>
    %81 = vector.broadcast %80 : vector<32x1xf32> to vector<32x128xf32>
    %82 = arith.addf %79, %81 : vector<32x128xf32>
    %cst_35 = arith.constant 2.000000e+01 : f32
    %83 = vector.broadcast %cst_35 : f32 to vector<32x128xf32>
    %84 = arith.minimumf %82, %83 : vector<32x128xf32>
    %85 = math.exp %84 : vector<32x128xf32>
    %cst_36 = arith.constant 1.000000e+00 : f32
    %86 = vector.broadcast %cst_36 : f32 to vector<32x128xf32>
    %87 = arith.addf %86, %85 : vector<32x128xf32>
    %88 = math.log %87 : vector<32x128xf32>
    %cst_37 = arith.constant 2.000000e+01 : f32
    %89 = vector.broadcast %cst_37 : f32 to vector<32x128xf32>
    %90 = arith.cmpf ogt, %82, %89 : vector<32x128xf32>
    %91 = arith.select %90, %82, %88 : vector<32x128xi1>, vector<32x128xf32>
    %c0_38 = arith.constant 0 : index
    %c0_39 = arith.constant 0 : index
    %92 = vector.load %arg6[%c0_38, %c0_39] : memref<3x32xf32, #tpu.memory_space<vmem>>, vector<3x32xf32>
    %cst_40 = arith.constant dense<0.000000e+00> : vector<3x128xf32>
    %93 = tpu.matmul %92, %91, %cst_40 {dimension_numbers = #tpu.dot_dimension_numbers<[1], [0], [0], [1], [0, 0, 1, 1], [], []>} : vector<3x32xf32>, vector<32x128xf32>, vector<3x128xf32> -> vector<3x128xf32>
    %c0_41 = arith.constant 0 : index
    %c0_42 = arith.constant 0 : index
    %94 = vector.load %arg7[%c0_41, %c0_42] : memref<3x1xf32, #tpu.memory_space<vmem>>, vector<3x1xf32>
    %95 = vector.broadcast %94 : vector<3x1xf32> to vector<3x128xf32>
    %96 = arith.addf %93, %95 : vector<3x128xf32>
    %c0_43 = arith.constant 0 : index
    %c0_44 = arith.constant 0 : index
    %97 = vector.load %arg8[%c0_43, %c0_44] : memref<3x128xf32, #tpu.memory_space<vmem>>, vector<3x128xf32>
    tpu.vector_store %arg8[%c0_43, %c0_44], %96 {strides = array<i32>} : memref<3x128xf32, #tpu.memory_space<vmem>>, vector<3x128xf32>,
    return
  }
  func.func @transform_0(%arg0: i32) -> (i32, i32) {
    %c0_i32 = arith.constant 0 : i32
    %c0_i32_0 = arith.constant 0 : i32
    return %c0_i32, %arg0 : i32, i32
  }
  func.func @transform_1(%arg0: i32) -> (i32, i32) {
    %c0_i32 = arith.constant 0 : i32
    %c0_i32_0 = arith.constant 0 : i32
    %c0_i32_1 = arith.constant 0 : i32
    return %c0_i32, %c0_i32_0 : i32, i32
  }
  func.func @transform_2(%arg0: i32) -> (i32, i32) {
    %c0_i32 = arith.constant 0 : i32
    %c0_i32_0 = arith.constant 0 : i32
    %c0_i32_1 = arith.constant 0 : i32
    return %c0_i32, %c0_i32_0 : i32, i32
  }
  func.func @transform_3(%arg0: i32) -> (i32, i32) {
    %c0_i32 = arith.constant 0 : i32
    %c0_i32_0 = arith.constant 0 : i32
    %c0_i32_1 = arith.constant 0 : i32
    return %c0_i32, %c0_i32_0 : i32, i32
  }
  func.func @transform_4(%arg0: i32) -> (i32, i32) {
    %c0_i32 = arith.constant 0 : i32
    %c0_i32_0 = arith.constant 0 : i32
    %c0_i32_1 = arith.constant 0 : i32
    return %c0_i32, %c0_i32_0 : i32, i32
  }
  func.func @transform_5(%arg0: i32) -> (i32, i32) {
    %c0_i32 = arith.constant 0 : i32
    %c0_i32_0 = arith.constant 0 : i32
    %c0_i32_1 = arith.constant 0 : i32
    return %c0_i32, %c0_i32_0 : i32, i32
  }
  func.func @transform_6(%arg0: i32) -> (i32, i32) {
    %c0_i32 = arith.constant 0 : i32
    %c0_i32_0 = arith.constant 0 : i32
    %c0_i32_1 = arith.constant 0 : i32
    return %c0_i32, %c0_i32_0 : i32, i32
  }
  func.func @transform_7(%arg0: i32) -> (i32, i32) {
    %c0_i32 = arith.constant 0 : i32
    %c0_i32_0 = arith.constant 0 : i32
    return %c0_i32, %arg0 : i32, i32
  }
}

</mosaic_0001>

<llo_original>
// kernel: tpu_custom_call.1
$region0: #{tpu_custom_call.1}
  #allocation0 [shape = 'u32[]', space=smem, size = 0x4, offset = 0x4, fixed_abs, tag = 'smem constant byte address 0x4 - core index']
  #allocation1 [shape = 'u32[72,128]{1,0:T(1,128)}', space=vmem, size = 0x9000, scoped, tag = 'internal scratch']
  %s0 = inlined_call_operand.vmem [shape: f32[2,256], index: 0, kind: input, shape index: {}]
  %s1 = inlined_call_operand.vmem [shape: f32[32,32], index: 1, kind: input, shape index: {}]
  %s2 = inlined_call_operand.vmem [shape: f32[32,1], index: 2, kind: input, shape index: {}]
  %s3 = inlined_call_operand.vmem [shape: f32[32,32], index: 3, kind: input, shape index: {}]
  %s4 = inlined_call_operand.vmem [shape: f32[32,1], index: 4, kind: input, shape index: {}]
  %s5 = inlined_call_operand.hbm [shape: f32[3,32], index: 5, kind: input, shape index: {}]
  %s6 = inlined_call_operand.vmem [shape: f32[3,1], index: 6, kind: input, shape index: {}]
  %s7 = inlined_call_operand.hbm [shape: f32[3,256], index: 7, kind: output, shape index: {}]
  %s8 = sld [smem:[#allocation0]]
  $region65: #{tpu_custom_call.1} parent=0
    _
  %s10 = ssub.s32 1, %s8
  %s11 = scalar_select 0, %s10, %s8
  $region1: #{tpu_custom_call.1} parent=0
    #allocation2 [shape = 'u8[2048]{0}', space=vmem, size = 0x800, scoped, tag = 'input window, operand 5, single buffered']
    #allocation3 [shape = 's32[2]{0}', space=sflag, size = 0x8, scoped, tag = 'scoped memory for tpu_custom_call.1']
    #allocation4 [shape = 's32[2]{0}', space=sflag, size = 0x8, scoped, tag = 'scoped memory for tpu_custom_call.1']
    #allocation5 [shape = 'u8[4096]{0}', space=vmem, size = 0x1000, scoped, tag = 'output window, operand 0']
    %12 = vsyncpa [#allocation3], 0
    %13 = vsyncpa [#allocation4], 0
    %s14 = scalar_lea.sflag [#allocation4], 1
    %15 = vsyncpa %s14, 0
    loop: start=0, step=1, limit=4
    $region2: #{tpu_custom_call.1} parent=1 // loop_pre_header
      _
    $region3: #{tpu_custom_call.1} parent=1 // loop_header
      %s17 = sphi 0, %s21
      %p18 = scmp.ge.s32.totalorder %s17, 4
      %s27 = sphi 0, %s29
      %s30 = sphi 0, %s27
      %s31 = sphi 0, %s30
      %s47 = sphi 0, %s31
      %s51 = sphi 0, %s51
      %s53 = sphi 0, %s51
      %s54 = sphi 0, %s53
      %s68 = sphi 0, %s54
      %s72 = sphi 0, %s72
      %s74 = sphi 0, %s72
      %s75 = sphi 0, %s74
      %s89 = sphi 0, %s75
      %s93 = sphi 0, %s93
      %s95 = sphi 0, %s93
      %s96 = sphi 0, %s95
      %s110 = sphi 0, %s96
      %s114 = sphi 0, %s114
      %s116 = sphi 0, %s114
      %s117 = sphi 0, %s116
      %s131 = sphi 0, %s117
      %s135 = sphi 0, %s135
      %s137 = sphi 0, %s135
      %s138 = sphi 0, %s137
      %s152 = sphi 0, %s138
      %s156 = sphi 0, %s156
      %s158 = sphi 0, %s156
      %s159 = sphi 0, %s158
      %s173 = sphi 0, %s159
      %s179 = sphi 0, %s181
      %s182 = sphi 0, %s179
      %s183 = sphi 0, %s182
      %s199 = sphi 0, %s183
    $region4: #{tpu_custom_call.1} parent=1 // loop_header_branch
      %20 = sbr.rel (%p18) target = $region8
    $region5: #{tpu_custom_call.1} parent=1 // loop_body
      %s22 = ssub.s32 %s17, 1
      %s23 = ssub.s32 %s17, 2
      %s24 = sadd.s32 %s17, 1
      %s25 = ssub.s32 %s17, %s24
      %p26 = scmp.eq.s32.totalorder %s25, 0
      %s28 = sadd.s32 %s27, 1
      %s29 = scalar_select %p26, %s27, %s28
      %p32 = pneg %p26
      %p33 = scmp.eq.s32.totalorder %s17, 1
      %p34 = por %p32, %p33
      %p35 = scmp.ne.s32.totalorder %s27, %s30
      %p36 = scmp.eq.s32.totalorder %s17, 0
      %p37 = por %p35, %p36
      %p38 = scmp.ne.s32.totalorder %s27, %s30
      %p39 = scmp.eq.s32.totalorder %s22, 1
      %p40 = por %p38, %p39
      %p41 = scmp.ne.s32.totalorder %s30, %s31
      %p42 = scmp.eq.s32.totalorder %s22, 0
      %p43 = por %p41, %p42
      %p44 = scmp.ne.s32.totalorder %s30, %s31
      %p45 = scmp.eq.s32.totalorder %s23, 1
      %p46 = por %p44, %p45
      %p48 = scmp.ne.s32.totalorder %s31, %s47
      %p49 = scmp.eq.s32.totalorder %s23, 0
      %p50 = por %p48, %p49
      %s52 = sadd.s32 %s51, 1
      %p55 = scmp.eq.s32.totalorder %s17, 1
      %p56 = scmp.ne.s32.totalorder %s51, %s53
      %p57 = scmp.eq.s32.totalorder %s17, 0
      %p58 = por %p56, %p57
      %p59 = scmp.ne.s32.totalorder %s51, %s53
      %p60 = scmp.eq.s32.totalorder %s22, 1
      %p61 = por %p59, %p60
      %p62 = scmp.ne.s32.totalorder %s53, %s54
      %p63 = scmp.eq.s32.totalorder %s22, 0
      %p64 = por %p62, %p63
      %p65 = scmp.ne.s32.totalorder %s53, %s54
      %p66 = scmp.eq.s32.totalorder %s23, 1
      %p67 = por %p65, %p66
      %p69 = scmp.ne.s32.totalorder %s54, %s68
      %p70 = scmp.eq.s32.totalorder %s23, 0
      %p71 = por %p69, %p70
      %s73 = sadd.s32 %s72, 1
      %p76 = scmp.eq.s32.totalorder %s17, 1
      %p77 = scmp.ne.s32.totalorder %s72, %s74
      %p78 = scmp.eq.s32.totalorder %s17, 0
      %p79 = por %p77, %p78
      %p80 = scmp.ne.s32.totalorder %s72, %s74
      %p81 = scmp.eq.s32.totalorder %s22, 1
      %p82 = por %p80, %p81
      %p83 = scmp.ne.s32.totalorder %s74, %s75
      %p84 = scmp.eq.s32.totalorder %s22, 0
      %p85 = por %p83, %p84
      %p86 = scmp.ne.s32.totalorder %s74, %s75
      %p87 = scmp.eq.s32.totalorder %s23, 1
      %p88 = por %p86, %p87
      %p90 = scmp.ne.s32.totalorder %s75, %s89
      %p91 = scmp.eq.s32.totalorder %s23, 0
      %p92 = por %p90, %p91
      %s94 = sadd.s32 %s93, 1
      %p97 = scmp.eq.s32.totalorder %s17, 1
      %p98 = scmp.ne.s32.totalorder %s93, %s95
      %p99 = scmp.eq.s32.totalorder %s17, 0
      %p100 = por %p98, %p99
      %p101 = scmp.ne.s32.totalorder %s93, %s95
      %p102 = scmp.eq.s32.totalorder %s22, 1
      %p103 = por %p101, %p102
      %p104 = scmp.ne.s32.totalorder %s95, %s96
      %p105 = scmp.eq.s32.totalorder %s22, 0
      %p106 = por %p104, %p105
      %p107 = scmp.ne.s32.totalorder %s95, %s96
      %p108 = scmp.eq.s32.totalorder %s23, 1
      %p109 = por %p107, %p108
      %p111 = scmp.ne.s32.totalorder %s96, %s110
      %p112 = scmp.eq.s32.totalorder %s23, 0
      %p113 = por %p111, %p112
      %s115 = sadd.s32 %s114, 1
      %p118 = scmp.eq.s32.totalorder %s17, 1
      %p119 = scmp.ne.s32.totalorder %s114, %s116
      %p120 = scmp.eq.s32.totalorder %s17, 0
      %p121 = por %p119, %p120
      %p122 = scmp.ne.s32.totalorder %s114, %s116
      %p123 = scmp.eq.s32.totalorder %s22, 1
      %p124 = por %p122, %p123
      %p125 = scmp.ne.s32.totalorder %s116, %s117
      %p126 = scmp.eq.s32.totalorder %s22, 0
      %p127 = por %p125, %p126
      %p128 = scmp.ne.s32.totalorder %s116, %s117
      %p129 = scmp.eq.s32.totalorder %s23, 1
      %p130 = por %p128, %p129
      %p132 = scmp.ne.s32.totalorder %s117, %s131
      %p133 = scmp.eq.s32.totalorder %s23, 0
      %p134 = por %p132, %p133
      %s136 = sadd.s32 %s135, 1
      %p139 = scmp.eq.s32.totalorder %s17, 1
      %p140 = scmp.ne.s32.totalorder %s135, %s137
      %p141 = scmp.eq.s32.totalorder %s17, 0
      %p142 = por %p140, %p141
      %p143 = scmp.ne.s32.totalorder %s135, %s137
      %p144 = scmp.eq.s32.totalorder %s22, 1
      %p145 = por %p143, %p144
      %p146 = scmp.ne.s32.totalorder %s137, %s138
      %p147 = scmp.eq.s32.totalorder %s22, 0
      %p148 = por %p146, %p147
      %p149 = scmp.ne.s32.totalorder %s137, %s138
      %p150 = scmp.eq.s32.totalorder %s23, 1
      %p151 = por %p149, %p150
      %p153 = scmp.ne.s32.totalorder %s138, %s152
      %p154 = scmp.eq.s32.totalorder %s23, 0
      %p155 = por %p153, %p154
      %s157 = sadd.s32 %s156, 1
      %p160 = scmp.eq.s32.totalorder %s17, 1
      %p161 = scmp.ne.s32.totalorder %s156, %s158
      %p162 = scmp.eq.s32.totalorder %s17, 0
      %p163 = por %p161, %p162
      %p164 = scmp.ne.s32.totalorder %s156, %s158
      %p165 = scmp.eq.s32.totalorder %s22, 1
      %p166 = por %p164, %p165
      %p167 = scmp.ne.s32.totalorder %s158, %s159
      %p168 = scmp.eq.s32.totalorder %s22, 0
      %p169 = por %p167, %p168
      %p170 = scmp.ne.s32.totalorder %s158, %s159
      %p171 = scmp.eq.s32.totalorder %s23, 1
      %p172 = por %p170, %p171
      %p174 = scmp.ne.s32.totalorder %s159, %s173
      %p175 = scmp.eq.s32.totalorder %s23, 0
      %p176 = por %p174, %p175
      %s177 = ssub.s32 %s17, %s24
      %p178 = scmp.eq.s32.totalorder %s177, 0
      %s180 = sadd.s32 %s179, 1
      %s181 = scalar_select %p178, %s179, %s180
      %p184 = pneg %p178
      %p185 = scmp.eq.s32.totalorder %s17, 1
      %p186 = por %p184, %p185
      %p187 = scmp.ne.s32.totalorder %s179, %s182
      %p188 = scmp.eq.s32.totalorder %s17, 0
      %p189 = por %p187, %p188
      %p190 = scmp.ne.s32.totalorder %s179, %s182
      %p191 = scmp.eq.s32.totalorder %s22, 1
      %p192 = por %p190, %p191
      %p193 = scmp.ne.s32.totalorder %s182, %s183
      %p194 = scmp.eq.s32.totalorder %s22, 0
      %p195 = por %p193, %p194
      %p196 = scmp.ne.s32.totalorder %s182, %s183
      %p197 = scmp.eq.s32.totalorder %s23, 1
      %p198 = por %p196, %p197
      %p200 = scmp.ne.s32.totalorder %s183, %s199
      %p201 = scmp.eq.s32.totalorder %s23, 0
      %p202 = por %p200, %p201
      %p203 = scmp.le.s32.totalorder 1, %s17
      %p204 = scmp.lt.s32.totalorder %s17, 3
      %p205 = pnand %p203, %p204
      %p206 = pneg %p205
      // Predicated region
      $region9: #{tpu_custom_call.1} parent=5 // pred_check
        _
      $region10: #{tpu_custom_call.1} parent=5 // pred_check_branch
        %208 = sbr.rel (%p205) target = $region12
      $region11: #{tpu_custom_call.1} parent=5 // pred_region
        %s209 = ssub.s32 %s17, 1
        // Predicated region
        $region13: #{tpu_custom_call.1} parent=11 // pred_check
          %p210 = pneg %p64
        $region14: #{tpu_custom_call.1} parent=11 // pred_check_branch
          %212 = sbr.rel (%p210) target = $region16
        $region15: #{tpu_custom_call.1} parent=11 // pred_region
          _
        $region16: #{tpu_custom_call.1} parent=11 // pred_fallthru
          _
        // Predicated region
        $region17: #{tpu_custom_call.1} parent=11 // pred_check
          %p213 = pneg %p85
        $region18: #{tpu_custom_call.1} parent=11 // pred_check_branch
          %215 = sbr.rel (%p213) target = $region20
        $region19: #{tpu_custom_call.1} parent=11 // pred_region
          _
        $region20: #{tpu_custom_call.1} parent=11 // pred_fallthru
          _
        // Predicated region
        $region21: #{tpu_custom_call.1} parent=11 // pred_check
          %p216 = pneg %p106
        $region22: #{tpu_custom_call.1} parent=11 // pred_check_branch
          %218 = sbr.rel (%p216) target = $region24
        $region23: #{tpu_custom_call.1} parent=11 // pred_region
          _
        $region24: #{tpu_custom_call.1} parent=11 // pred_fallthru
          _
        // Predicated region
        $region25: #{tpu_custom_call.1} parent=11 // pred_check
          %p219 = pneg %p127
        $region26: #{tpu_custom_call.1} parent=11 // pred_check_branch
          %221 = sbr.rel (%p219) target = $region28
        $region27: #{tpu_custom_call.1} parent=11 // pred_region
          _
        $region28: #{tpu_custom_call.1} parent=11 // pred_fallthru
          _
        // Predicated region
        $region29: #{tpu_custom_call.1} parent=11 // pred_check
          %p222 = pneg %p148
        $region30: #{tpu_custom_call.1} parent=11 // pred_check_branch
          %224 = sbr.rel (%p222) target = $region32
        $region31: #{tpu_custom_call.1} parent=11 // pred_region
          %226 = vsyncadd [#allocation3], 0
          %s228 = sshll.u32 %s5, 4
          %s229 = int_to_ptr.hbm [resolvable:$true] %s228
          %s230 = sshll.u32 [#allocation2], 4
          %s231 = int_to_ptr.vmem [resolvable:$true] %s230
          %233 = dma.hbm_to_vmem [thread:$0]  %s229, 64, %s231, [#allocation3]
        $region32: #{tpu_custom_call.1} parent=11 // pred_fallthru
          _
        // Predicated region
        $region33: #{tpu_custom_call.1} parent=11 // pred_check
          %p234 = pneg %p169
        $region34: #{tpu_custom_call.1} parent=11 // pred_check_branch
          %236 = sbr.rel (%p234) target = $region36
        $region35: #{tpu_custom_call.1} parent=11 // pred_region
          _
        $region36: #{tpu_custom_call.1} parent=11 // pred_fallthru
          _
      $region12: #{tpu_custom_call.1} parent=5 // pred_fallthru
        _
      %p237 = scmp.lt.s32.totalorder %s17, 2
      // Predicated region
      $region37: #{tpu_custom_call.1} parent=5 // pred_check
        %p238 = pneg %p237
      $region38: #{tpu_custom_call.1} parent=5 // pred_check_branch
        %240 = sbr.rel (%p238) target = $region40
      $region39: #{tpu_custom_call.1} parent=5 // pred_region
        // Predicated region
        $region41: #{tpu_custom_call.1} parent=39 // pred_check
          %p241 = pneg %p37
        $region42: #{tpu_custom_call.1} parent=39 // pred_check_branch
          %243 = sbr.rel (%p241) target = $region44
        $region43: #{tpu_custom_call.1} parent=39 // pred_region
          %p244 = scmp.lt.s32.totalorder %s17, 1
          %s245 = scalar_select %p244, %s17, 1
          %s246 = smul.addr %s245, 2
          %s247 = scalar_lea.vmem %s0, %s246
        $region44: #{tpu_custom_call.1} parent=39 // pred_fallthru
          _
      $region40: #{tpu_custom_call.1} parent=5 // pred_fallthru
        _
      %p248 = scmp.le.s32.totalorder 1, %s17
      %p249 = scmp.lt.s32.totalorder %s17, 3
      %p250 = pnand %p248, %p249
      %p251 = pneg %p250
      // Predicated region
      $region45: #{tpu_custom_call.1} parent=5 // pred_check
        _
      $region46: #{tpu_custom_call.1} parent=5 // pred_check_branch
        %253 = sbr.rel (%p250) target = $region48
      $region47: #{tpu_custom_call.1} parent=5 // pred_region
        %s254 = ssub.s32 %s17, 1
        // Predicated region
        $region49: #{tpu_custom_call.1} parent=47 // pred_check
          %p255 = pneg %p148
        $region50: #{tpu_custom_call.1} parent=47 // pred_check_branch
          %257 = sbr.rel (%p255) target = $region52
        $region51: #{tpu_custom_call.1} parent=47 // pred_region
          %259 = dma.done [#allocation3], 64
        $region52: #{tpu_custom_call.1} parent=47 // pred_fallthru
          _
        %p260 = scmp.lt.s32.totalorder %s22, 1
        %s261 = scalar_select %p260, %s22, 1
        %s262 = smul.addr %s261, 2
        %s263 = scalar_lea.vmem %s0, %s262
        %p264 = pneg %p43
        %p265 = pneg %p40
        %p266 = pneg %p64
        %p267 = pneg %p61
        %p268 = pneg %p85
        %p269 = pneg %p82
        %p270 = pneg %p106
        %p271 = pneg %p103
        %p272 = pneg %p127
        %p273 = pneg %p124
        %p274 = pneg %p148
        %p275 = pneg %p145
        %p276 = pneg %p169
        %p277 = pneg %p166
        %p278 = pneg %p195
        %p279 = pneg %p192
        %s280 = sand.u32 %s182, 1
        %s281 = scalar_lea.sflag [#allocation4], %s280
        %s282 = sand.u32 %s182, 1
        %s283 = smul.addr %s282, 4
        %s284 = scalar_lea.vmem [#allocation5], %s283
        %p285 = scmp.lt.s32.totalorder %s22, 1
        %s286 = scalar_select %p285, %s22, 1
        %s287 = smul.addr %s286, 2
        %s288 = scalar_lea.vmem %s0, %s287
        %v289 = vld [vmem:[%s288] sm:$0x3]
        %v290 = vadd.f32 %v289, 1.5707964
        %v292 = vrot.slane %v290, 6
        %vm294 = vcmask 1041408
        %v295 = vsel %vm294, %v289, %v292
        %v296 = vand.u32 2147483647, %v295
        %vm297 = vcmp.le.f32.partialorder %v296, 0.7853982
        %vm298 = vcmp.lt.s32.totalorder %v295, 0
        %v299 = vand.u32 %v295, 2139095040
        %v300 = vshrl.u32 %v299, 23
        %v301 = vsub.s32 %v300, 127
        %v302 = vand.u32 2147483647, %v295
        %v303 = vand.u32 %v302, 8388607
        %v304 = vor.u32 %v303, 8388608
        %v305 = vsub.s32 0, %v304
        %v306 = vadd.s32 %v301, 1
        %vm307 = vcmp.gt.s32.totalorder %v306, 0
        %v308 = vsel %vm307, %v306, 0
        %v309 = vshrl.u32 %v308, 5
        %v310 = vand.u32 %v308, 31
        %v311 = vsub.s32 32, %v310
        %v312 = vshrl.u32 683565275, %v311
        %v313 = vshll.u32 683565275, %v310
        %v314 = vshrl.u32 2475754826, %v311
        %v315 = vor.u32 %v313, %v314
        %v316 = vshll.u32 2475754826, %v310
        %v317 = vshrl.u32 2131351028, %v311
        %v318 = vor.u32 %v316, %v317
        %v319 = vshll.u32 2131351028, %v310
        %v320 = vshrl.u32 2102212464, %v311
        %v321 = vor.u32 %v319, %v320
        %v322 = vshll.u32 2102212464, %v310
        %v323 = vshrl.u32 920167782, %v311
        %v324 = vor.u32 %v322, %v323
        %v325 = vshll.u32 920167782, %v310
        %v326 = vshrl.u32 1326507024, %v311
        %v327 = vor.u32 %v325, %v326
        %vm328 = vcmp.lt.s32.totalorder %v309, 1
        %vm329 = vcmp.lt.s32.totalorder %v309, 2
        %vm330 = vcmp.lt.s32.totalorder %v309, 3
        %vm331 = vcmp.lt.s32.totalorder %v309, 4
        %v332 = vsel %vm328, %v312, %v315
        %v333 = vsel %vm331, %v321, 2102212464
        %v334 = vsel %vm330, %v318, %v333
        %v335 = vsel %vm329, %v332, %v334
        %v336 = vsel %vm328, %v315, %v318
        %v337 = vsel %vm331, %v324, 920167782
        %v338 = vsel %vm330, %v321, %v337
        %v339 = vsel %vm329, %v336, %v338
        %v340 = vsel %vm328, %v318, %v321
        %v341 = vsel %vm331, %v327, 1326507024
        %v342 = vsel %vm330, %v324, %v341
        %v343 = vsel %vm329, %v340, %v342
        %v344 = vshll.u32 %v304, 8
        %v345 = vand.u32 %v344, 65535
        %v346 = vshrl.u32 %v344, 16
        %v347 = vand.u32 %v343, 65535
        %v348 = vshrl.u32 %v343, 16
        %v349 = vmul.u32 %v345, %v347
        %v350 = vmul.u32 %v345, %v348
        %v351 = vmul.u32 %v346, %v347
        %v352 = vmul.u32 %v346, %v348
        %v353 = vshll.u32 %v350, 16
        %v354 = vshrl.u32 %v350, 16
        %v355 = vshll.u32 %v351, 16
        %v356 = vshrl.u32 %v351, 16
        %vm357 = vc.u32 %v349, %v353
        %v358 = vsel %vm357, 1, 0
        %v359 = vadd.s32 %v349, %v353
        %v360 = vadd.s32 %v352, %v358
        %vm361 = vc.u32 %v359, %v355
        %v362 = vsel %vm361, 1, 0
        %v363 = vadd.s32 %v359, %v355
        %v364 = vadd.s32 %v360, %v362
        %v365 = vadd.s32 %v364, %v354
        %v366 = vadd.s32 %v365, %v356
        %v367 = vand.u32 %v344, 65535
        %v368 = vshrl.u32 %v344, 16
        %v369 = vand.u32 %v339, 65535
        %v370 = vshrl.u32 %v339, 16
        %v371 = vmul.u32 %v367, %v369
        %v372 = vmul.u32 %v367, %v370
        %v373 = vmul.u32 %v368, %v369
        %v374 = vmul.u32 %v368, %v370
        %v375 = vshll.u32 %v372, 16
        %v376 = vshrl.u32 %v372, 16
        %v377 = vshll.u32 %v373, 16
        %v378 = vshrl.u32 %v373, 16
        %vm379 = vc.u32 %v371, %v375
        %v380 = vsel %vm379, 1, 0
        %v381 = vadd.s32 %v371, %v375
        %v382 = vadd.s32 %v374, %v380
        %vm383 = vc.u32 %v381, %v377
        %v384 = vsel %vm383, 1, 0
        %v385 = vadd.s32 %v381, %v377
        %v386 = vadd.s32 %v382, %v384
        %v387 = vadd.s32 %v386, %v376
        %v388 = vadd.s32 %v387, %v378
        %v389 = vmul.u32 %v344, %v335
        %v390 = vadd.s32 %v366, %v385
        %vm391 = vc.u32 %v366, %v385
        %v392 = vadd.s32 %v388, 1
        %v393 = vsel %vm391, %v392, %v388
        %v394 = vadd.s32 %v389, %v393
        %v395 = vadd.s32 %v394, 536870912
        %v396 = vshrl.u32 %v395, 30
        %v397 = vshll.u32 %v396, 30
        %v398 = vsub.s32 %v394, %v397
        %vm399 = vcmp.lt.s32.totalorder %v398, 0
        %v400 = vsub.s32 0, %v398
        %v401 = vsel %vm399, %v400, %v398
        %v402 = vclz %v401
        %v403 = vsub.s32 %v402, 2
        %vm404 = vcmp.gt.s32.totalorder 0, %v403
        %v405 = vsel %vm404, 0, %v403
        %v406 = vsub.s32 32, %v405
        %v407 = vshll.u32 %v398, %v405
        %v408 = vshrl.u32 %v390, %v406
        %v409 = vor.u32 %v407, %v408
        %v410 = vsub.s32 4294967266, %v405
        %v411 = vadd.s32 %v410, 127
        %v412 = vshll.u32 %v411, 23
        %v413 = vor.u32 4788187, %v412
        %v414 = vand.u32 2147483647, %v413
        %v416 = vcvt.s32.f32 %v409
        %v417 = vmul.f32 %v416, %v414
        %v418 = vxor.u32 %v417, 2147483648
        %v419 = vsel %vm298, %v418, %v417
        %v420 = vsub.s32 4, %v396
        %v421 = vsel %vm298, %v420, %v396
        %v422 = vsel %vm297, %v295, %v419
        %v423 = vsel %vm297, 0, %v421
        %v424 = vmul.f32 %v422, %v422
        %v425 = vmul.f32 %v424, -0.001358992
        %v426 = vadd.f32 %v425, 0.041655596
        %v427 = vmul.f32 %v424, %v426
        %v428 = vadd.f32 %v427, -0.4999988
        %v429 = vmul.f32 %v424, %v428
        %v430 = vadd.f32 1.0, %v429
        %v431 = vmul.f32 %v422, %v422
        %v432 = vmul.f32 %v431, -0.00019511016
        %v433 = vadd.f32 %v432, 0.008332121
        %v434 = vmul.f32 %v431, %v433
        %v435 = vadd.f32 %v434, -0.16666654
        %v436 = vmul.f32 %v431, %v435
        %v437 = vadd.f32 %v436, 1.0
        %v438 = vmul.f32 %v437, %v422
        %vm439 = vweird.f32 %v295
        %v440 = vadd.s32 %v423, 3
        %v441 = vand.u32 %v440, 3
        %vm442 = vcmp.lt.s32.totalorder %v441, 2
        %vm443 = vcmp.eq.s32.totalorder %v441, 0
        %v444 = vxor.u32 %v438, 2147483648
        %v445 = vsel %vm443, %v430, %v444
        %vm446 = vcmp.eq.s32.totalorder %v441, 2
        %v447 = vxor.u32 %v430, 2147483648
        %v448 = vsel %vm446, %v447, %v438
        %v449 = vsel %vm442, %v445, %v448
        %v450 = vsel %vm439, nan, %v449
        %v451 = vmul.f32 %v450, 2.0
        %v453 = vrot.slane %v450, 2
        %v455 = vmul.f32 %v451, %v453
        %v456 = vmul.f32 %v450, %v450
        %v457 = vmul.f32 %v456, 2.0
        %v458 = vsub.f32 1.0, %v457
        %v459 = vmul.f32 %v455, 2.0
        %v460 = vmul.f32 %v459, %v458
        %v461 = vmul.f32 %v455, %v455
        %v462 = vmul.f32 %v461, 2.0
        %v463 = vsub.f32 1.0, %v462
        %v464 = vmul.f32 %v460, 2.0
        %v465 = vmul.f32 %v464, %v463
        %v466 = vmul.f32 %v460, %v460
        %v467 = vmul.f32 %v466, 2.0
        %v468 = vsub.f32 1.0, %v467
        %v469 = vmul.f32 %v465, 2.0
        %v470 = vmul.f32 %v469, %v468
        %v471 = vmul.f32 %v465, %v465
        %v472 = vmul.f32 %v471, 2.0
        %v473 = vsub.f32 1.0, %v472
        %v474 = vmul.f32 %v470, 2.0
        %v475 = vmul.f32 %v474, %v473
        %v476 = vmul.f32 %v470, %v470
        %v477 = vmul.f32 %v476, 2.0
        %v478 = vsub.f32 1.0, %v477
        %v479 = vmul.f32 %v475, 2.0
        %v480 = vmul.f32 %v479, %v478
        %v481 = vmul.f32 %v475, %v475
        %v482 = vmul.f32 %v481, 2.0
        %v483 = vsub.f32 1.0, %v482
        %v484 = vmul.f32 %v480, 2.0
        %v485 = vmul.f32 %v484, %v483
        %v486 = vmul.f32 %v480, %v480
        %v487 = vmul.f32 %v486, 2.0
        %v488 = vsub.f32 1.0, %v487
        %v490 = vrot.slane %v455, 4
        %v493 = vrot.slane %v458, 2
        %v496 = vrot.slane %v463, 6
        %v499 = vrot.slane %v465, 4
        %v502 = vrot.slane %v468, 2
        %v505 = vrot.slane %v473, 6
        %v508 = vrot.slane %v475, 4
        %v511 = vrot.slane %v478, 2
        %v514 = vrot.slane %v483, 6
        %v517 = vrot.slane %v485, 4
        %v520 = vrot.slane %v488, 2
        %vm522 = vcmask 1043456
        %v523 = vsel %vm522, %v450, %v490
        %vm524 = vcmask 1045504
        %v525 = vsel %vm524, %v523, %v493
        %v526 = vsel %vm294, %v460, %v496
        %v527 = vsel %vm522, %v526, %v499
        %v528 = vsel %vm524, %v527, %v502
        %v529 = vsel %vm294, %v470, %v505
        %v530 = vsel %vm522, %v529, %v508
        %v531 = vsel %vm524, %v530, %v511
        %v532 = vsel %vm294, %v480, %v514
        %v533 = vsel %vm522, %v532, %v517
        %v534 = vsel %vm524, %v533, %v520
        %v535 = vld [vmem:[%s1] sm:$0xff]
        %v536 = vld [vmem:[%s1 + $0x8] sm:$0xff]
        %v537 = vld [vmem:[%s1 + $0x10] sm:$0xff]
        %v538 = vld [vmem:[%s1 + $0x18] sm:$0xff]
        %v539 = vld [vmem:[%s2] sm:$0xff]
        %v540 = vld [vmem:[%s2 + $0x8] sm:$0xff]
        %v541 = vld [vmem:[%s2 + $0x10] sm:$0xff]
        %v542 = vld [vmem:[%s2 + $0x18] sm:$0xff]
        %544 = vset.pattern.permute.xlu0 0
        %545 = vperm.xlu0 %544, %v539
        %v546 = vpop.permute.xlu0 %545
        %549 = vset.pattern.permute.xlu0 0
        %550 = vperm.xlu0 %549, %v540
        %v551 = vpop.permute.xlu0 %550
        %554 = vset.pattern.permute.xlu0 0
        %555 = vperm.xlu0 %554, %v541
        %v556 = vpop.permute.xlu0 %555
        %559 = vset.pattern.permute.xlu0 0
        %560 = vperm.xlu0 %559, %v542
        %v561 = vpop.permute.xlu0 %560
        %vm563 = vcmask 261120
        %v565 = vsel %vm563, %v535, 0
        %v568 = vsel %vm563, %v536, 0
        %v571 = vsel %vm563, %v537, 0
        %v574 = vsel %vm563, %v538, 0
        %576 = vmatpush.msra.mxu0 0.0
        %577 = vmatpush.msra.mxu0 0.0
        %578 = vmatpush.msra.mxu0 0.0
        %579 = vmatpush.msra.mxu0 0.0
        %580 = vmatpush.msra.mxu0 0.0
        %581 = vmatpush.msra.mxu0 0.0
        %582 = vmatpush.msra.mxu0 0.0
        %583 = vmatpush.msra.mxu0 0.0
        %584 = vmatpush.msra.mxu0 0.0
        %585 = vmatpush.msra.mxu0 0.0
        %586 = vmatpush.msra.mxu0 0.0
        %587 = vmatpush.msra.mxu0 0.0
        %588 = vmatpush.msra.mxu0 %v534
        %589 = vmatpush.msra.mxu0 %v531
        %590 = vmatpush.msra.mxu0 %v528
        %591 = vmatpush.msra.mxu0 %v525
        %592 = vmatmul.f32.gmra.mxu0 %v565
        %v593 = vpop.f32.mrf.mxu0
        %v594 = vadd.f32 %v546, %v593
        %595 = vmatmul.f32.gmra.mxu0 %v568
        %v596 = vpop.f32.mrf.mxu0
        %v597 = vadd.f32 %v551, %v596
        %598 = vmatmul.f32.gmra.mxu0 %v571
        %v599 = vpop.f32.mrf.mxu0
        %v600 = vadd.f32 %v556, %v599
        %601 = vmatmul.f32.gmra.mxu0 %v574
        %v602 = vpop.f32.mrf.mxu0
        %v603 = vadd.f32 %v561, %v602
        %604 = vdwg.mxu0
        %v605 = vmin.f32 %v594, 20.0
        %v606 = vmin.f32 %v597, 20.0
        %v607 = vmin.f32 %v600, 20.0
        %v608 = vmin.f32 %v603, 20.0
        %v609 = vmul.f32 %v605, 1.442695
        %v610 = vpow.pop %v609
        %v611 = vmul.f32 %v606, 1.442695
        %v612 = vpow.pop %v611
        %v613 = vmul.f32 %v607, 1.442695
        %v614 = vpow.pop %v613
        %v615 = vmul.f32 %v608, 1.442695
        %v616 = vpow.pop %v615
        %v617 = vadd.f32 %v610, 1.0
        %v618 = vadd.f32 %v612, 1.0
        %v619 = vadd.f32 %v614, 1.0
        %v620 = vadd.f32 %v616, 1.0
        %v621 = vlog2.pop %v617
        %v622 = vmul.f32 %v621, 0.6931472
        %v623 = vlog2.pop %v618
        %v624 = vmul.f32 %v623, 0.6931472
        %v625 = vlog2.pop %v619
        %v626 = vmul.f32 %v625, 0.6931472
        %v627 = vlog2.pop %v620
        %v628 = vmul.f32 %v627, 0.6931472
        %vm629 = vcmp.gt.f32.partialorder %v594, 20.0
        %vm630 = vcmp.gt.f32.partialorder %v597, 20.0
        %vm631 = vcmp.gt.f32.partialorder %v600, 20.0
        %vm632 = vcmp.gt.f32.partialorder %v603, 20.0
        %v633 = vsel %vm629, %v594, %v622
        %v634 = vsel %vm630, %v597, %v624
        %v635 = vsel %vm631, %v600, %v626
        %v636 = vsel %vm632, %v603, %v628
        %v637 = vld [vmem:[%s3] sm:$0xff]
        %v638 = vld [vmem:[%s3 + $0x8] sm:$0xff]
        %v639 = vld [vmem:[%s3 + $0x10] sm:$0xff]
        %v640 = vld [vmem:[%s3 + $0x18] sm:$0xff]
        %v641 = vld [vmem:[%s4] sm:$0xff]
        %v642 = vld [vmem:[%s4 + $0x8] sm:$0xff]
        %v643 = vld [vmem:[%s4 + $0x10] sm:$0xff]
        %v644 = vld [vmem:[%s4 + $0x18] sm:$0xff]
        %646 = vset.pattern.permute.xlu0 0
        %647 = vperm.xlu0 %646, %v641
        %v648 = vpop.permute.xlu0 %647
        %651 = vset.pattern.permute.xlu0 0
        %652 = vperm.xlu0 %651, %v642
        %v653 = vpop.permute.xlu0 %652
        %656 = vset.pattern.permute.xlu0 0
        %657 = vperm.xlu0 %656, %v643
        %v658 = vpop.permute.xlu0 %657
        %661 = vset.pattern.permute.xlu0 0
        %662 = vperm.xlu0 %661, %v644
        %v663 = vpop.permute.xlu0 %662
        %v666 = vsel %vm563, %v637, 0
        %v669 = vsel %vm563, %v638, 0
        %v672 = vsel %vm563, %v639, 0
        %v675 = vsel %vm563, %v640, 0
        %677 = vmatpush.msra.mxu0 0.0
        %678 = vmatpush.msra.mxu0 0.0
        %679 = vmatpush.msra.mxu0 0.0
        %680 = vmatpush.msra.mxu0 0.0
        %681 = vmatpush.msra.mxu0 0.0
        %682 = vmatpush.msra.mxu0 0.0
        %683 = vmatpush.msra.mxu0 0.0
        %684 = vmatpush.msra.mxu0 0.0
        %685 = vmatpush.msra.mxu0 0.0
        %686 = vmatpush.msra.mxu0 0.0
        %687 = vmatpush.msra.mxu0 0.0
        %688 = vmatpush.msra.mxu0 0.0
        %689 = vmatpush.msra.mxu0 %v636
        %690 = vmatpush.msra.mxu0 %v635
        %691 = vmatpush.msra.mxu0 %v634
        %692 = vmatpush.msra.mxu0 %v633
        %693 = vmatmul.f32.gmra.mxu0 %v666
        %v694 = vpop.f32.mrf.mxu0
        %v695 = vadd.f32 %v648, %v694
        %696 = vmatmul.f32.gmra.mxu0 %v669
        %v697 = vpop.f32.mrf.mxu0
        %v698 = vadd.f32 %v653, %v697
        %699 = vmatmul.f32.gmra.mxu0 %v672
        %v700 = vpop.f32.mrf.mxu0
        %v701 = vadd.f32 %v658, %v700
        %702 = vmatmul.f32.gmra.mxu0 %v675
        %v703 = vpop.f32.mrf.mxu0
        %v704 = vadd.f32 %v663, %v703
        %705 = vdwg.mxu0
        %v706 = vmin.f32 %v695, 20.0
        %v707 = vmin.f32 %v698, 20.0
        %v708 = vmin.f32 %v701, 20.0
        %v709 = vmin.f32 %v704, 20.0
        %v710 = vmul.f32 %v706, 1.442695
        %v711 = vpow.pop %v710
        %v712 = vmul.f32 %v707, 1.442695
        %v713 = vpow.pop %v712
        %v714 = vmul.f32 %v708, 1.442695
        %v715 = vpow.pop %v714
        %v716 = vmul.f32 %v709, 1.442695
        %v717 = vpow.pop %v716
        %v718 = vadd.f32 %v711, 1.0
        %v719 = vadd.f32 %v713, 1.0
        %v720 = vadd.f32 %v715, 1.0
        %v721 = vadd.f32 %v717, 1.0
        %v722 = vlog2.pop %v718
        %v723 = vmul.f32 %v722, 0.6931472
        %v724 = vlog2.pop %v719
        %v725 = vmul.f32 %v724, 0.6931472
        %v726 = vlog2.pop %v720
        %v727 = vmul.f32 %v726, 0.6931472
        %v728 = vlog2.pop %v721
        %v729 = vmul.f32 %v728, 0.6931472
        %vm730 = vcmp.gt.f32.partialorder %v695, 20.0
        %vm731 = vcmp.gt.f32.partialorder %v698, 20.0
        %vm732 = vcmp.gt.f32.partialorder %v701, 20.0
        %vm733 = vcmp.gt.f32.partialorder %v704, 20.0
        %v734 = vsel %vm730, %v695, %v723
        %v735 = vsel %vm731, %v698, %v725
        %v736 = vsel %vm732, %v701, %v727
        %v737 = vsel %vm733, %v704, %v729
        %v738 = vld [vmem:[#allocation2] sm:$0x7]
        %v739 = vld [vmem:[%s6] sm:$0x7]
        %741 = vset.pattern.permute.xlu0 0
        %742 = vperm.xlu0 %741, %v739
        %v743 = vpop.permute.xlu0 %742
        %v746 = vsel %vm563, %v738, 0
        %748 = vmatpush.msra.mxu0 0.0
        %749 = vmatpush.msra.mxu0 0.0
        %750 = vmatpush.msra.mxu0 0.0
        %751 = vmatpush.msra.mxu0 0.0
        %752 = vmatpush.msra.mxu0 0.0
        %753 = vmatpush.msra.mxu0 0.0
        %754 = vmatpush.msra.mxu0 0.0
        %755 = vmatpush.msra.mxu0 0.0
        %756 = vmatpush.msra.mxu0 0.0
        %757 = vmatpush.msra.mxu0 0.0
        %758 = vmatpush.msra.mxu0 0.0
        %759 = vmatpush.msra.mxu0 0.0
        %760 = vmatpush.msra.mxu0 %v737
        %761 = vmatpush.msra.mxu0 %v736
        %762 = vmatpush.msra.mxu0 %v735
        %763 = vmatpush.msra.mxu0 %v734
        %764 = vmatmul.f32.gmra.mxu0 %v746
        %v765 = vpop.f32.mrf.mxu0
        %v766 = vadd.f32 %v743, %v765
        %767 = vdwg.mxu0
        %768 = vst [vmem:[%s284] sm:$0x7] %v766
        %s769 = sand.u32 %s182, 1
        %s770 = scalar_lea.sflag [#allocation4], %s769
        %s771 = sand.u32 %s182, 1
        %s772 = smul.addr %s771, 4
        %s773 = scalar_lea.vmem [#allocation5], %s772
        // Predicated region
        $region53: #{tpu_custom_call.1} parent=47 // pred_check
          %p774 = pneg %p192
        $region54: #{tpu_custom_call.1} parent=47 // pred_check_branch
          %776 = sbr.rel (%p774) target = $region56
        $region55: #{tpu_custom_call.1} parent=47 // pred_region
          %778 = vsyncadd %s770, 0
          %s779 = smul.addr %s22, 4
          %s780 = scalar_lea.hbm %s7, %s779
          %s782 = sshll.u32 %s773, 4
          %s783 = int_to_ptr.vmem [resolvable:$true] %s782
          %s784 = sshll.u32 %s780, 4
          %s785 = int_to_ptr.hbm [resolvable:$true] %s784
          %787 = dma.vmem_to_hbm [thread:$0]  %s783, 64, %s785, %s770
        $region56: #{tpu_custom_call.1} parent=47 // pred_fallthru
          _
      $region48: #{tpu_custom_call.1} parent=5 // pred_fallthru
        _
      %p788 = scmp.le.s32.totalorder 2, %s17
      // Predicated region
      $region57: #{tpu_custom_call.1} parent=5 // pred_check
        %p789 = pneg %p788
      $region58: #{tpu_custom_call.1} parent=5 // pred_check_branch
        %791 = sbr.rel (%p789) target = $region60
      $region59: #{tpu_custom_call.1} parent=5 // pred_region
        %s792 = ssub.s32 %s17, 2
        // Predicated region
        $region61: #{tpu_custom_call.1} parent=59 // pred_check
          %p793 = pneg %p198
        $region62: #{tpu_custom_call.1} parent=59 // pred_check_branch
          %795 = sbr.rel (%p793) target = $region64
        $region63: #{tpu_custom_call.1} parent=59 // pred_region
          %s796 = sand.u32 %s183, 1
          %s797 = scalar_lea.sflag [#allocation4], %s796
          %s798 = sand.u32 %s183, 1
          %s799 = smul.addr %s798, 4
          %s800 = scalar_lea.vmem [#allocation5], %s799
          %802 = dma.done %s797, 64
        $region64: #{tpu_custom_call.1} parent=59 // pred_fallthru
          _
      $region60: #{tpu_custom_call.1} parent=5 // pred_fallthru
        _
    $region6: #{tpu_custom_call.1} parent=1 // loop_footer
      %s21 = sadd.s32 1, %s17
    $region7: #{tpu_custom_call.1} parent=1 // loop_footer_branch
      %16 = sbr.rel target = $region3
    $region8: #{tpu_custom_call.1} parent=1 // loop_exit
      _
    %803 = vsyncpa [#allocation3], 1
    %s804 = scalar_lea.sflag [#allocation3], 1
    %805 = vsyncpa %s804, 1
    %806 = vsyncpa [#allocation4], 1
    %s807 = scalar_lea.sflag [#allocation4], 1
    %808 = vsyncpa %s807, 1

</llo_original>
